<compile_context>
chip_gen: v5e
topology: v5e:2x2
jax: 0.10.0
libtpu: 0.0.40
codegen_flags: <defaults>
</compile_context>

<pallas_src>
import functools

import jax
import jax.numpy as jnp
from jax.experimental import pallas as pl
from jax.experimental.pallas import tpu as pltpu


def _cdiv(a, b):
    return -(-a // b)


def _round_up(a, m):
    return _cdiv(a, m) * m


def _me_kernel(x_ref, w_ref, o_ref, acc_ref, *, inv_hw):
    # x_ref:   (G, T, C, HW_TILE)  lane-dense spatial tile of G batch groups
    # w_ref:   (3,) in SMEM        Conv1d(1, 1, 3) taps
    # o_ref:   (G, T, C)           compact sigmoid gate (written on last tile)
    # acc_ref: (G, T, C) f32 VMEM  pooled-sum accumulator
    k = pl.program_id(1)

    @pl.when(k == 0)
    def _():
        acc_ref[...] = jnp.zeros_like(acc_ref)

    # f32-accumulating spatial sum; the zero padding of HW (if any) does not
    # change the sum, so dividing by the true HW below stays exact.
    acc_ref[...] += jnp.sum(x_ref[...], axis=-1, dtype=jnp.float32)

    @pl.when(k == pl.num_programs(1) - 1)
    def _():
        g, t, c = acc_ref.shape
        pooled = acc_ref[...] * inv_hw                                # (G, T, C)

        # temporal difference, last segment zero-padded (F.pad(..., (0,...,0,1)));
        # pool-then-diff == diff-then-pool because the mean is linear.
        diff = jnp.concatenate(
            [pooled[:, 1:, :] - pooled[:, :-1, :],
             jnp.zeros((g, 1, c), jnp.float32)], axis=1)              # (G, T, C)

        # Conv1d(k=3, pad=1, bias=False) over the channel axis: shift-and-scale
        # on the VPU, no MXU round trip for a 3-tap contraction.
        zc = jnp.zeros((g, t, 1), jnp.float32)
        d_prev = jnp.concatenate([zc, diff[:, :, :-1]], axis=2)       # d[c-1]
        d_next = jnp.concatenate([diff[:, :, 1:], zc], axis=2)        # d[c+1]
        y = w_ref[0] * d_prev + w_ref[1] * diff + w_ref[2] * d_next   # (G, T, C)

        o_ref[...] = jax.nn.sigmoid(y).astype(o_ref.dtype)


def me_forward(x, conv_weight, n_segment=8, *,
               hw_tile_max=2048, target_block_bytes=4 << 20):
    """x: (N*T, C, H, W); conv_weight: Conv1d weight of shape (1, 1, 3) or (3,)."""
    nt, c, h, w = x.shape
    assert nt % n_segment == 0, "leading dim must be a multiple of n_segment"
    n_batch = nt // n_segment
    hw = h * w
    itemsize = jnp.dtype(x.dtype).itemsize

    # --- spatial tiling: lane-dense (multiple-of-128) tiles; pad HW with zeros
    #     so it divides evenly (zeros do not perturb the pooled SUM). ---
    hw128 = _round_up(hw, 128)
    num_hw = _cdiv(hw128, hw_tile_max)
    hw_tile = _round_up(_cdiv(hw128, num_hw), 128)
    hw_pad = num_hw * hw_tile

    x5 = x.reshape(n_batch, n_segment, c, hw)
    if hw_pad != hw:
        # TODO(synk): mask in-kernel instead of zero-padding to avoid this HBM
        # copy when H*W is not a multiple of 128 (late ResNet stages: 7x7, 14x14).
        x5 = jnp.pad(x5, ((0, 0), (0, 0), (0, 0), (0, hw_pad - hw)))

    # --- group blocking: move multi-group blocks per step when possible, but
    #     keep >= 2 group blocks so both v7x TensorCores get work. ---
    group_step_bytes = n_segment * c * hw_tile * itemsize
    g = int(max(1, min(n_batch, target_block_bytes // group_step_bytes)))
    if n_batch >= 2:
        g = min(g, max(1, n_batch // 2))
    while n_batch % g:
        g -= 1
    num_group_blocks = n_batch // g

    taps = jnp.asarray(conv_weight, jnp.float32).reshape(-1)          # (3,)

    # --- VMEM budget (double-buffered in/out + f32 accumulator) ---
    block_in = g * n_segment * c * hw_tile * itemsize
    block_out = g * n_segment * c * itemsize
    scratch_bytes = g * n_segment * c * 4
    vmem_needed = 2 * block_in + 2 * block_out + scratch_bytes
    vmem_limit = int(min(64 << 20, max(32 << 20, 2 * vmem_needed)))

    gate_bytes = n_batch * n_segment * c * itemsize
    cost = pl.CostEstimate(
        flops=n_batch * n_segment * c * (hw_pad + 8),
        transcendentals=n_batch * n_segment * c,
        bytes_accessed=x5.size * itemsize + gate_bytes + taps.size * 4)

    kernel = functools.partial(_me_kernel, inv_hw=1.0 / hw)

    gate = pl.pallas_call(
        kernel,
        out_shape=jax.ShapeDtypeStruct((n_batch, n_segment, c), x.dtype),
        grid=(num_group_blocks, num_hw),
        in_specs=[
            pl.BlockSpec((g, n_segment, c, hw_tile), lambda n, k: (n, 0, 0, k)),
            pl.BlockSpec(memory_space=pltpu.MemorySpace.SMEM),        # conv taps
        ],
        out_specs=pl.BlockSpec((g, n_segment, c), lambda n, k: (n, 0, 0)),
        scratch_shapes=[pltpu.VMEM((g, n_segment, c), jnp.float32)],
        compiler_params=pltpu.CompilerParams(
            dimension_semantics=("parallel", "arbitrary"),
            vmem_limit_bytes=vmem_limit),
        cost_estimate=cost,
    )(x5, taps)

    # expand_as(x): broadcast OUTSIDE the kernel so XLA fuses it into the
    # consumer instead of the kernel paying an HW-times larger HBM store.
    gate = gate.reshape(nt, c, 1, 1)
    return jnp.broadcast_to(gate, (nt, c, h, w))


def _reference(x, conv_weight, n_segment):
    nt, c, h, w = x.shape
    n = nt // n_segment
    taps = jnp.asarray(conv_weight, jnp.float32).reshape(-1)
    x5 = x.reshape(n, n_segment, c, h, w)
    diff = x5[:, 1:] - x5[:, :-1]
    diff = jnp.concatenate([diff, jnp.zeros((n, 1, c, h, w), x.dtype)], axis=1)
    pooled = diff.reshape(nt, c, h * w).mean(axis=-1)                  # (nt, c)
    p = jnp.pad(pooled, ((0, 0), (1, 1)))
    y = taps[0] * p[:, :-2] + taps[1] * p[:, 1:-1] + taps[2] * p[:, 2:]
    gate = jax.nn.sigmoid(y)
    return jnp.broadcast_to(gate[:, :, None, None], x.shape)


if __name__ == "__main__":
    n_segment = 8
    n_batch = 2
    C, H, W = 16, 16, 16
    NT = n_batch * n_segment        # 16 frames

    key = jax.random.PRNGKey(0)
    kx, kw = jax.random.split(key)
    x = jax.random.normal(kx, (NT, C, H, W), dtype=jnp.float32)
    conv_weight = jax.random.normal(kw, (1, 1, 3), dtype=jnp.float32) * 0.5

    out = me_forward(x, conv_weight, n_segment=n_segment)
    out = jax.block_until_ready(out)

    ref = _reference(x, conv_weight, n_segment)
    assert out.shape == x.shape
    assert jnp.allclose(out, ref, atol=1e-5, rtol=1e-5), float(
        jnp.max(jnp.abs(out - ref)))

    print("KERNEL_OK")
</pallas_src>

<mosaic_0001>
module attributes {stable_mosaic.version = 11 : i64} {
  func.func @_me_kernel(%arg0: i32, %arg1: i32, %arg2: memref<1x8x16x256xf32, #tpu.memory_space<vmem>>, %arg3: memref<3xf32, #tpu.memory_space<smem>>, %arg4: memref<1x8x16xf32, #tpu.memory_space<vmem>>, %arg5: memref<1x8x16xf32, #tpu.memory_space<vmem>>) attributes {dimension_semantics = [#tpu.dimension_semantics<parallel>, #tpu.dimension_semantics<arbitrary>], iteration_bounds = array<i64: 2, 1>, scalar_prefetch = 0 : i64, scratch_operands = 1 : i64, tpu.core_type = #tpu.core_type<tc>, window_params = [{transform_indices = @transform_0, window_bounds = array<i64: 1, 8, 16, 256>}, {transform_indices = @transform_1, window_bounds = array<i64: 3>}, {transform_indices = @transform_2, window_bounds = array<i64: 1, 8, 16>}]} {
    %c0_i32 = arith.constant 0 : i32
    %0 = arith.cmpi eq, %arg1, %c0_i32 : i32
    %1 = arith.extui %0 : i1 to i32
    %c0_i32_0 = arith.constant 0 : i32
    %2 = arith.cmpi ne, %1, %c0_i32_0 : i32
    scf.if %2 {
      %cst_12 = arith.constant 0.000000e+00 : f32
      %11 = vector.broadcast %cst_12 : f32 to vector<1x8x16xf32>
      %c0_13 = arith.constant 0 : index
      %c0_14 = arith.constant 0 : index
      %c0_15 = arith.constant 0 : index
      %12 = vector.load %arg5[%c0_13, %c0_14, %c0_15] : memref<1x8x16xf32, #tpu.memory_space<vmem>>, vector<1x8x16xf32>
      tpu.vector_store %arg5[%c0_13, %c0_14, %c0_15], %11 {strides = array<i32>} : memref<1x8x16xf32, #tpu.memory_space<vmem>>, vector<1x8x16xf32>,
    } else {
    }
    %c0 = arith.constant 0 : index
    %c0_1 = arith.constant 0 : index
    %c0_2 = arith.constant 0 : index
    %3 = vector.load %arg5[%c0, %c0_1, %c0_2] : memref<1x8x16xf32, #tpu.memory_space<vmem>>, vector<1x8x16xf32>
    %c0_3 = arith.constant 0 : index
    %c0_4 = arith.constant 0 : index
    %c0_5 = arith.constant 0 : index
    %c0_6 = arith.constant 0 : index
    %4 = vector.load %arg2[%c0_3, %c0_4, %c0_5, %c0_6] : memref<1x8x16x256xf32, #tpu.memory_space<vmem>>, vector<1x8x16x256xf32>
    %cst = arith.constant dense<0.000000e+00> : vector<1x8x16xf32>
    %5 = vector.multi_reduction <add>, %4, %cst [3] : vector<1x8x16x256xf32> to vector<1x8x16xf32>
    %6 = arith.addf %3, %5 : vector<1x8x16xf32>
    %c0_7 = arith.constant 0 : index
    %c0_8 = arith.constant 0 : index
    %c0_9 = arith.constant 0 : index
    %7 = vector.load %arg5[%c0_7, %c0_8, %c0_9] : memref<1x8x16xf32, #tpu.memory_space<vmem>>, vector<1x8x16xf32>
    tpu.vector_store %arg5[%c0_7, %c0_8, %c0_9], %6 {strides = array<i32>} : memref<1x8x16xf32, #tpu.memory_space<vmem>>, vector<1x8x16xf32>,
    %c0_i32_10 = arith.constant 0 : i32
    %8 = arith.cmpi eq, %arg1, %c0_i32_10 : i32
    %9 = arith.extui %8 : i1 to i32
    %c0_i32_11 = arith.constant 0 : i32
    %10 = arith.cmpi ne, %9, %c0_i32_11 : i32
    scf.if %10 {
      %c0_12 = arith.constant 0 : index
      %c0_13 = arith.constant 0 : index
      %c0_14 = arith.constant 0 : index
      %11 = vector.load %arg5[%c0_12, %c0_13, %c0_14] : memref<1x8x16xf32, #tpu.memory_space<vmem>>, vector<1x8x16xf32>
      %cst_15 = arith.constant 3.906250e-03 : f32
      %12 = vector.broadcast %cst_15 : f32 to vector<1x8x16xf32>
      %13 = arith.mulf %11, %12 : vector<1x8x16xf32>
      %14 = vector.extract_strided_slice %13 {offsets = [0, 1, 0], sizes = [1, 7, 16], strides = [1, 1, 1]} : vector<1x8x16xf32> to vector<1x7x16xf32>
      %15 = vector.extract_strided_slice %13 {offsets = [0, 0, 0], sizes = [1, 7, 16], strides = [1, 1, 1]} : vector<1x8x16xf32> to vector<1x7x16xf32>
      %16 = arith.subf %14, %15 : vector<1x7x16xf32>
      %cst_16 = arith.constant 0.000000e+00 : f32
      %17 = vector.broadcast %cst_16 : f32 to vector<1x1x16xf32>
      %18 = tpu.concatenate %16, %17 in 1 : vector<1x7x16xf32>, vector<1x1x16xf32> -> vector<1x8x16xf32>
      %cst_17 = arith.constant 0.000000e+00 : f32
      %19 = vector.broadcast %cst_17 : f32 to vector<1x8x1xf32>
      %20 = vector.extract_strided_slice %18 {offsets = [0, 0, 0], sizes = [1, 8, 15], strides = [1, 1, 1]} : vector<1x8x16xf32> to vector<1x8x15xf32>
      %21 = tpu.concatenate %19, %20 in 2 : vector<1x8x1xf32>, vector<1x8x15xf32> -> vector<1x8x16xf32>
      %22 = vector.extract_strided_slice %18 {offsets = [0, 0, 1], sizes = [1, 8, 15], strides = [1, 1, 1]} : vector<1x8x16xf32> to vector<1x8x15xf32>
      %23 = tpu.concatenate %22, %19 in 2 : vector<1x8x15xf32>, vector<1x8x1xf32> -> vector<1x8x16xf32>
      %c0_18 = arith.constant 0 : index
      %24 = memref.load %arg3[%c0_18] : memref<3xf32, #tpu.memory_space<smem>>
      %25 = vector.broadcast %24 : f32 to vector<1x8x16xf32>
      %26 = arith.mulf %25, %21 : vector<1x8x16xf32>
      %c1 = arith.constant 1 : index
      %27 = memref.load %arg3[%c1] : memref<3xf32, #tpu.memory_space<smem>>
      %28 = vector.broadcast %27 : f32 to vector<1x8x16xf32>
      %29 = arith.mulf %28, %18 : vector<1x8x16xf32>
      %30 = arith.addf %26, %29 : vector<1x8x16xf32>
      %c2 = arith.constant 2 : index
      %31 = memref.load %arg3[%c2] : memref<3xf32, #tpu.memory_space<smem>>
      %32 = vector.broadcast %31 : f32 to vector<1x8x16xf32>
      %33 = arith.mulf %32, %23 : vector<1x8x16xf32>
      %34 = arith.addf %30, %33 : vector<1x8x16xf32>
      %35 = arith.negf %34 : vector<1x8x16xf32>
      %36 = math.exp %35 : vector<1x8x16xf32>
      %cst_19 = arith.constant 1.000000e+00 : f32
      %37 = vector.broadcast %cst_19 : f32 to vector<1x8x16xf32>
      %38 = arith.addf %37, %36 : vector<1x8x16xf32>
      %39 = arith.divf %37, %38 : vector<1x8x16xf32>
      %c0_20 = arith.constant 0 : index
      %c0_21 = arith.constant 0 : index
      %c0_22 = arith.constant 0 : index
      %40 = vector.load %arg4[%c0_20, %c0_21, %c0_22] : memref<1x8x16xf32, #tpu.memory_space<vmem>>, vector<1x8x16xf32>
      tpu.vector_store %arg4[%c0_20, %c0_21, %c0_22], %39 {strides = array<i32>} : memref<1x8x16xf32, #tpu.memory_space<vmem>>, vector<1x8x16xf32>,
    } else {
    }
    return
  }
  func.func @transform_0(%arg0: i32, %arg1: i32) -> (i32, i32, i32, i32) {
    %c0_i32 = arith.constant 0 : i32
    %c0_i32_0 = arith.constant 0 : i32
    %c0_i32_1 = arith.constant 0 : i32
    return %arg0, %c0_i32, %c0_i32_0, %arg1 : i32, i32, i32, i32
  }
  func.func @transform_1(%arg0: i32, %arg1: i32) -> i32 {
    %c0_i32 = arith.constant 0 : i32
    %c0_i32_0 = arith.constant 0 : i32
    return %c0_i32 : i32
  }
  func.func @transform_2(%arg0: i32, %arg1: i32) -> (i32, i32, i32) {
    %c0_i32 = arith.constant 0 : i32
    %c0_i32_0 = arith.constant 0 : i32
    %c0_i32_1 = arith.constant 0 : i32
    return %arg0, %c0_i32, %c0_i32_0 : i32, i32, i32
  }
}

</mosaic_0001>

<llo_original>
// kernel: tpu_custom_call.1
$region0: #{tpu_custom_call.1}
  #allocation0 [shape = 'u32[]', space=smem, size = 0x4, offset = 0x4, fixed_abs, tag = 'smem constant byte address 0x4 - core index']
  #allocation1 [shape = 'u32[72,128]{1,0:T(1,128)}', space=vmem, size = 0x9000, scoped, tag = 'internal scratch']
  #allocation2 [shape = 'f32[1,8,16]{2,1,0:T(8,128)}', space=vmem, size = 0x1000, scoped, tag = 'scratch operand']
  %s0 = inlined_call_operand.hbm [shape: f32[2,8,16,256], index: 0, kind: input, shape index: {}]
  %s1 = inlined_call_operand.hbm [shape: f32[3], index: 1, kind: input, shape index: {}]
  %s2 = inlined_call_operand.hbm [shape: f32[2,8,16], index: 2, kind: output, shape index: {}]
  %s3 = sld [smem:[#allocation0]]
  $region57: #{tpu_custom_call.1} parent=0
    _
  %s5 = ssub.s32 1, %s3
  %s6 = scalar_select 0, %s5, %s3
  $region1: #{tpu_custom_call.1} parent=0
    #allocation3 [shape = 'u8[262144]{0}', space=vmem, size = 0x40000, scoped, tag = 'input window, operand 0']
    #allocation4 [shape = 's32[2]{0}', space=sflag, size = 0x8, scoped, tag = 'scoped memory for tpu_custom_call.1']
    #allocation5 [shape = 's32[2]{0}', space=sflag, size = 0x8, scoped, tag = 'scoped memory for tpu_custom_call.1']
    #allocation6 [shape = 's32[2]{0}', space=sflag, size = 0x8, scoped, tag = 'scoped memory for tpu_custom_call.1']
    #allocation7 [shape = 'u8[512]{0}', space=smem, size = 0x200, scoped, tag = 'input window, operand 1, single buffered']
    #allocation8 [shape = 'u8[8192]{0}', space=vmem, size = 0x2000, scoped, tag = 'output window, operand 0']
    %7 = vsyncpa [#allocation4], 0
    %s8 = scalar_lea.sflag [#allocation4], 1
    %9 = vsyncpa %s8, 0
    %10 = vsyncpa [#allocation6], 0
    %11 = vsyncpa [#allocation5], 0
    %s12 = scalar_lea.sflag [#allocation5], 1
    %13 = vsyncpa %s12, 0
    loop: start=0, step=1, limit=4
    $region2: #{tpu_custom_call.1} parent=1 // loop_pre_header
      _
    $region3: #{tpu_custom_call.1} parent=1 // loop_header
      %s15 = sphi 0, %s19
      %p16 = scmp.ge.s32.totalorder %s15, 4
      %s22 = sphi 0, %s34
      %s23 = sphi 0, %s30
      %s24 = sphi 0, %s22
      %s25 = sphi 0, %s23
      %s26 = sphi 0, %s24
      %s27 = sphi 0, %s25
      %s39 = sphi 0, %s41
      %s42 = sphi 0, %s39
      %s43 = sphi 0, %s42
      %s59 = sphi 0, %s43
      %s63 = sphi 0, %s63
      %s65 = sphi 0, %s63
      %s66 = sphi 0, %s65
      %s80 = sphi 0, %s66
      %s86 = sphi 0, %s88
      %s89 = sphi 0, %s86
      %s90 = sphi 0, %s89
      %s106 = sphi 0, %s90
    $region4: #{tpu_custom_call.1} parent=1 // loop_header_branch
      %18 = sbr.rel (%p16) target = $region8
    $region5: #{tpu_custom_call.1} parent=1 // loop_body
      %s20 = ssub.s32 %s15, 1
      %s21 = ssub.s32 %s15, 2
      %s28 = sadd.s32 1, %s23
      %p29 = scmp.ge.s32.totalorder %s28, 1
      %s30 = scalar_select %p29, 0, %s28
      %s31 = sadd.s32 1, %s22
      %s32 = scalar_select %p29, %s31, %s22
      %p33 = scmp.ge.s32.totalorder %s32, 2
      %s34 = scalar_select %p33, 0, %s32
      %s35 = ssub.s32 %s22, %s34
      %s36 = ssub.s32 %s23, %s30
      %s37 = sor.u32 %s35, %s36
      %p38 = scmp.eq.s32.totalorder %s37, 0
      %s40 = sadd.s32 %s39, 1
      %s41 = scalar_select %p38, %s39, %s40
      %p44 = pneg %p38
      %p45 = scmp.eq.s32.totalorder %s15, 1
      %p46 = por %p44, %p45
      %p47 = scmp.ne.s32.totalorder %s39, %s42
      %p48 = scmp.eq.s32.totalorder %s15, 0
      %p49 = por %p47, %p48
      %p50 = scmp.ne.s32.totalorder %s39, %s42
      %p51 = scmp.eq.s32.totalorder %s20, 1
      %p52 = por %p50, %p51
      %p53 = scmp.ne.s32.totalorder %s42, %s43
      %p54 = scmp.eq.s32.totalorder %s20, 0
      %p55 = por %p53, %p54
      %p56 = scmp.ne.s32.totalorder %s42, %s43
      %p57 = scmp.eq.s32.totalorder %s21, 1
      %p58 = por %p56, %p57
      %p60 = scmp.ne.s32.totalorder %s43, %s59
      %p61 = scmp.eq.s32.totalorder %s21, 0
      %p62 = por %p60, %p61
      %s64 = sadd.s32 %s63, 1
      %p67 = scmp.eq.s32.totalorder %s15, 1
      %p68 = scmp.ne.s32.totalorder %s63, %s65
      %p69 = scmp.eq.s32.totalorder %s15, 0
      %p70 = por %p68, %p69
      %p71 = scmp.ne.s32.totalorder %s63, %s65
      %p72 = scmp.eq.s32.totalorder %s20, 1
      %p73 = por %p71, %p72
      %p74 = scmp.ne.s32.totalorder %s65, %s66
      %p75 = scmp.eq.s32.totalorder %s20, 0
      %p76 = por %p74, %p75
      %p77 = scmp.ne.s32.totalorder %s65, %s66
      %p78 = scmp.eq.s32.totalorder %s21, 1
      %p79 = por %p77, %p78
      %p81 = scmp.ne.s32.totalorder %s66, %s80
      %p82 = scmp.eq.s32.totalorder %s21, 0
      %p83 = por %p81, %p82
      %s84 = ssub.s32 %s22, %s34
      %p85 = scmp.eq.s32.totalorder %s84, 0
      %s87 = sadd.s32 %s86, 1
      %s88 = scalar_select %p85, %s86, %s87
      %p91 = pneg %p85
      %p92 = scmp.eq.s32.totalorder %s15, 1
      %p93 = por %p91, %p92
      %p94 = scmp.ne.s32.totalorder %s86, %s89
      %p95 = scmp.eq.s32.totalorder %s15, 0
      %p96 = por %p94, %p95
      %p97 = scmp.ne.s32.totalorder %s86, %s89
      %p98 = scmp.eq.s32.totalorder %s20, 1
      %p99 = por %p97, %p98
      %p100 = scmp.ne.s32.totalorder %s89, %s90
      %p101 = scmp.eq.s32.totalorder %s20, 0
      %p102 = por %p100, %p101
      %p103 = scmp.ne.s32.totalorder %s89, %s90
      %p104 = scmp.eq.s32.totalorder %s21, 1
      %p105 = por %p103, %p104
      %p107 = scmp.ne.s32.totalorder %s90, %s106
      %p108 = scmp.eq.s32.totalorder %s21, 0
      %p109 = por %p107, %p108
      %p110 = scmp.le.s32.totalorder 1, %s15
      %p111 = scmp.lt.s32.totalorder %s15, 3
      %p112 = pnand %p110, %p111
      %p113 = pneg %p112
      // Predicated region
      $region9: #{tpu_custom_call.1} parent=5 // pred_check
        _
      $region10: #{tpu_custom_call.1} parent=5 // pred_check_branch
        %115 = sbr.rel (%p112) target = $region12
      $region11: #{tpu_custom_call.1} parent=5 // pred_region
        %s116 = ssub.s32 %s15, 1
        // Predicated region
        $region13: #{tpu_custom_call.1} parent=11 // pred_check
          %p117 = pneg %p76
        $region14: #{tpu_custom_call.1} parent=11 // pred_check_branch
          %119 = sbr.rel (%p117) target = $region16
        $region15: #{tpu_custom_call.1} parent=11 // pred_region
          %121 = vsyncadd [#allocation6], 0
          %s123 = sshll.u32 %s1, 4
          %s124 = int_to_ptr.hbm [resolvable:$true] %s123
          %126 = dma.hbm_to_smem %s124, 16, [#allocation7], [#allocation6]
        $region16: #{tpu_custom_call.1} parent=11 // pred_fallthru
          _
      $region12: #{tpu_custom_call.1} parent=5 // pred_fallthru
        _
      %p127 = scmp.lt.s32.totalorder %s15, 2
      // Predicated region
      $region17: #{tpu_custom_call.1} parent=5 // pred_check
        %p128 = pneg %p127
      $region18: #{tpu_custom_call.1} parent=5 // pred_check_branch
        %130 = sbr.rel (%p128) target = $region20
      $region19: #{tpu_custom_call.1} parent=5 // pred_region
        // Predicated region
        $region21: #{tpu_custom_call.1} parent=19 // pred_check
          %p131 = pneg %p49
        $region22: #{tpu_custom_call.1} parent=19 // pred_check_branch
          %133 = sbr.rel (%p131) target = $region24
        $region23: #{tpu_custom_call.1} parent=19 // pred_region
          %s134 = sand.u32 %s39, 1
          %s135 = scalar_lea.sflag [#allocation4], %s134
          %s136 = sand.u32 %s39, 1
          %s137 = smul.addr %s136, 256
          %s138 = scalar_lea.vmem [#allocation3], %s137
          %s139 = smul.u32 2, %s23
          %141 = vsyncadd %s135, 0
          %s142 = smul.addr %s22, 32
          %s143 = sadd.s32 %s139, %s142
          %s144 = smul.addr %s143, 8
          %s145 = scalar_lea.hbm %s0, %s144
          %s146 = sshll.u32 %s145, 4
          %s147 = int_to_ptr.hbm [resolvable:$true] %s146
          %s148 = sshll.u32 %s138, 4
          %s149 = int_to_ptr.vmem [resolvable:$true] %s148
          %154 = dma.hbm_to_vmem [thread:$0]  %s147, 4096, %s149, %s135, 256, 256, 16
        $region24: #{tpu_custom_call.1} parent=19 // pred_fallthru
          _
      $region20: #{tpu_custom_call.1} parent=5 // pred_fallthru
        _
      %p155 = scmp.le.s32.totalorder 1, %s15
      %p156 = scmp.lt.s32.totalorder %s15, 3
      %p157 = pnand %p155, %p156
      %p158 = pneg %p157
      // Predicated region
      $region25: #{tpu_custom_call.1} parent=5 // pred_check
        _
      $region26: #{tpu_custom_call.1} parent=5 // pred_check_branch
        %160 = sbr.rel (%p157) target = $region28
      $region27: #{tpu_custom_call.1} parent=5 // pred_region
        %s161 = ssub.s32 %s15, 1
        %s162 = sand.u32 %s42, 1
        %s163 = scalar_lea.sflag [#allocation4], %s162
        %s164 = sand.u32 %s42, 1
        %s165 = smul.addr %s164, 256
        %s166 = scalar_lea.vmem [#allocation3], %s165
        // Predicated region
        $region29: #{tpu_custom_call.1} parent=27 // pred_check
          %p167 = pneg %p55
        $region30: #{tpu_custom_call.1} parent=27 // pred_check_branch
          %169 = sbr.rel (%p167) target = $region32
        $region31: #{tpu_custom_call.1} parent=27 // pred_region
          %171 = dma.done %s163, 4096
        $region32: #{tpu_custom_call.1} parent=27 // pred_fallthru
          _
        // Predicated region
        $region33: #{tpu_custom_call.1} parent=27 // pred_check
          %p172 = pneg %p76
        $region34: #{tpu_custom_call.1} parent=27 // pred_check_branch
          %174 = sbr.rel (%p172) target = $region36
        $region35: #{tpu_custom_call.1} parent=27 // pred_region
          %176 = dma.done [#allocation6], 16
        $region36: #{tpu_custom_call.1} parent=27 // pred_fallthru
          _
        %177 = sfence
        %s178 = sand.u32 %s42, 1
        %s179 = scalar_lea.sflag [#allocation4], %s178
        %s180 = sand.u32 %s42, 1
        %s181 = smul.addr %s180, 256
        %s182 = scalar_lea.vmem [#allocation3], %s181
        %p183 = pneg %p55
        %p184 = pneg %p52
        %p185 = pneg %p76
        %p186 = pneg %p73
        %p187 = pneg %p102
        %p188 = pneg %p99
        %s189 = sand.u32 %s89, 1
        %s190 = scalar_lea.sflag [#allocation5], %s189
        %s191 = sand.u32 %s89, 1
        %s192 = smul.addr %s191, 8
        %s193 = scalar_lea.vmem [#allocation8], %s192
        %s194 = smul.u32 2, %s25
        %p195 = scmp.eq.s32.totalorder %s25, 0
        // Predicated region
        $region37: #{tpu_custom_call.1} parent=27 // pred_check
          %p196 = pneg %p195
        $region38: #{tpu_custom_call.1} parent=27 // pred_check_branch
          %198 = sbr.rel (%p196) target = $region40
        $region39: #{tpu_custom_call.1} parent=27 // pred_region
          %vm199 = vcmask 130048
          %200 = vst.msk [vmem:[#allocation2] sm:$0xff] %vm199, 0.0
        $region40: #{tpu_custom_call.1} parent=27 // pred_fallthru
          _
        %v201 = vld [vmem:[#allocation2] sm:$0xff]
        %v202 = vld [vmem:[%s166] sm:$0xff]
        %v203 = vld [vmem:[%s166 + $0x8] sm:$0xff]
        %v204 = vld [vmem:[%s166 + $0x10] sm:$0xff]
        %v205 = vld [vmem:[%s166 + $0x18] sm:$0xff]
        %v206 = vld [vmem:[%s166 + $0x20] sm:$0xff]
        %v207 = vld [vmem:[%s166 + $0x28] sm:$0xff]
        %v208 = vld [vmem:[%s166 + $0x30] sm:$0xff]
        %v209 = vld [vmem:[%s166 + $0x38] sm:$0xff]
        %v210 = vld [vmem:[%s166 + $0x40] sm:$0xff]
        %v211 = vld [vmem:[%s166 + $0x48] sm:$0xff]
        %v212 = vld [vmem:[%s166 + $0x50] sm:$0xff]
        %v213 = vld [vmem:[%s166 + $0x58] sm:$0xff]
        %v214 = vld [vmem:[%s166 + $0x60] sm:$0xff]
        %v215 = vld [vmem:[%s166 + $0x68] sm:$0xff]
        %v216 = vld [vmem:[%s166 + $0x70] sm:$0xff]
        %v217 = vld [vmem:[%s166 + $0x78] sm:$0xff]
        %v218 = vld [vmem:[%s166 + $0x80] sm:$0xff]
        %v219 = vld [vmem:[%s166 + $0x88] sm:$0xff]
        %v220 = vld [vmem:[%s166 + $0x90] sm:$0xff]
        %v221 = vld [vmem:[%s166 + $0x98] sm:$0xff]
        %v222 = vld [vmem:[%s166 + $0xa0] sm:$0xff]
        %v223 = vld [vmem:[%s166 + $0xa8] sm:$0xff]
        %v224 = vld [vmem:[%s166 + $0xb0] sm:$0xff]
        %v225 = vld [vmem:[%s166 + $0xb8] sm:$0xff]
        %v226 = vld [vmem:[%s166 + $0xc0] sm:$0xff]
        %v227 = vld [vmem:[%s166 + $0xc8] sm:$0xff]
        %v228 = vld [vmem:[%s166 + $0xd0] sm:$0xff]
        %v229 = vld [vmem:[%s166 + $0xd8] sm:$0xff]
        %v230 = vld [vmem:[%s166 + $0xe0] sm:$0xff]
        %v231 = vld [vmem:[%s166 + $0xe8] sm:$0xff]
        %v232 = vld [vmem:[%s166 + $0xf0] sm:$0xff]
        %v233 = vld [vmem:[%s166 + $0xf8] sm:$0xff]
        %v234 = vadd.f32 %v202, %v203
        %235 = vadd.xlane.f32.xlu0 %v234
        %v236 = vpop.xlane.xlu0 %235
        %v237 = vadd.f32 %v204, %v205
        %238 = vadd.xlane.f32.xlu0 %v237
        %v239 = vpop.xlane.xlu0 %238
        %v240 = vadd.f32 %v206, %v207
        %241 = vadd.xlane.f32.xlu0 %v240
        %v242 = vpop.xlane.xlu0 %241
        %v243 = vadd.f32 %v208, %v209
        %244 = vadd.xlane.f32.xlu0 %v243
        %v245 = vpop.xlane.xlu0 %244
        %v246 = vadd.f32 %v210, %v211
        %247 = vadd.xlane.f32.xlu0 %v246
        %v248 = vpop.xlane.xlu0 %247
        %v249 = vadd.f32 %v212, %v213
        %250 = vadd.xlane.f32.xlu0 %v249
        %v251 = vpop.xlane.xlu0 %250
        %v252 = vadd.f32 %v214, %v215
        %253 = vadd.xlane.f32.xlu0 %v252
        %v254 = vpop.xlane.xlu0 %253
        %v255 = vadd.f32 %v216, %v217
        %256 = vadd.xlane.f32.xlu0 %v255
        %v257 = vpop.xlane.xlu0 %256
        %v258 = vadd.f32 %v218, %v219
        %259 = vadd.xlane.f32.xlu0 %v258
        %v260 = vpop.xlane.xlu0 %259
        %v261 = vadd.f32 %v220, %v221
        %262 = vadd.xlane.f32.xlu0 %v261
        %v263 = vpop.xlane.xlu0 %262
        %v264 = vadd.f32 %v222, %v223
        %265 = vadd.xlane.f32.xlu0 %v264
        %v266 = vpop.xlane.xlu0 %265
        %v267 = vadd.f32 %v224, %v225
        %268 = vadd.xlane.f32.xlu0 %v267
        %v269 = vpop.xlane.xlu0 %268
        %v270 = vadd.f32 %v226, %v227
        %271 = vadd.xlane.f32.xlu0 %v270
        %v272 = vpop.xlane.xlu0 %271
        %v273 = vadd.f32 %v228, %v229
        %274 = vadd.xlane.f32.xlu0 %v273
        %v275 = vpop.xlane.xlu0 %274
        %v276 = vadd.f32 %v230, %v231
        %277 = vadd.xlane.f32.xlu0 %v276
        %v278 = vpop.xlane.xlu0 %277
        %v279 = vadd.f32 %v232, %v233
        %280 = vadd.xlane.f32.xlu0 %v279
        %v281 = vpop.xlane.xlu0 %280
        %v298 = vlaneseq
        %v299 = vand.u32 %v298, 127
        %v300 = vperm.slane %v236, %v299
        %v301 = vadd.s32 %v299, 4294967288
        %v302 = vperm.slane %v239, %v301
        %vm303 = vcmask 130112
        %v304 = vsel %vm303, %v302, %v300
        %v305 = vperm.slane %v242, %v299
        %v306 = vperm.slane %v245, %v301
        %v307 = vsel %vm303, %v306, %v305
        %v308 = vperm.slane %v248, %v299
        %v309 = vperm.slane %v251, %v301
        %v310 = vsel %vm303, %v309, %v308
        %v311 = vperm.slane %v254, %v299
        %v312 = vperm.slane %v257, %v301
        %v313 = vsel %vm303, %v312, %v311
        %v314 = vperm.slane %v260, %v299
        %v315 = vperm.slane %v263, %v301
        %v316 = vsel %vm303, %v315, %v314
        %v317 = vperm.slane %v266, %v299
        %v318 = vperm.slane %v269, %v301
        %v319 = vsel %vm303, %v318, %v317
        %v320 = vperm.slane %v272, %v299
        %v321 = vperm.slane %v275, %v301
        %v322 = vsel %vm303, %v321, %v320
        %v323 = vperm.slane %v278, %v299
        %v324 = vperm.slane %v281, %v301
        %v325 = vsel %vm303, %v324, %v323
        %vm326 = vcmask 1041409
        %v327 = vsel %vm326, %v307, %v304
        %vm328 = vcmask 1042434
        %v329 = vsel %vm328, %v310, %v327
        %vm330 = vcmask 1043459
        %v331 = vsel %vm330, %v313, %v329
        %vm332 = vcmask 1044484
        %v333 = vsel %vm332, %v316, %v331
        %vm334 = vcmask 1045509
        %v335 = vsel %vm334, %v319, %v333
        %vm336 = vcmask 1046534
        %v337 = vsel %vm336, %v322, %v335
        %vm338 = vcmask 1047559
        %v339 = vsel %vm338, %v325, %v337
        %v341 = vadd.f32 %v201, %v339
        %vm342 = vcmask 130048
        %343 = vst.msk [vmem:[#allocation2] sm:$0xff] %vm342, %v341
        // Predicated region
        $region41: #{tpu_custom_call.1} parent=27 // pred_check
          %p344 = pneg %p195
        $region42: #{tpu_custom_call.1} parent=27 // pred_check_branch
          %346 = sbr.rel (%p344) target = $region44
        $region43: #{tpu_custom_call.1} parent=27 // pred_region
          %v347 = vld [vmem:[#allocation2] sm:$0xff]
          %v348 = vmul.f32 %v347, 0.00390625
          %v350 = vrot.slane %v348, 7
          %v352 = vsub.f32 %v348, %v350
          %v354 = vrot.slane %v352, 1
          %vm356 = vcmask 1046528
          %v357 = vsel %vm356, %v354, 0.0
          %359 = vrot.lane.b32.xlu0 %v357, 1
          %v360 = vpop.permute.xlu0 %359
          %vm362 = vcmask 7168
          %v363 = vsel %vm362, 0.0, %v360
          %364 = vrot.lane.b32.xlu0 %v357, 127
          %v365 = vpop.permute.xlu0 %364
          %vm367 = vcmask 121856
          %v368 = vsel %vm367, %v365, 0.0
          %s369 = sld [smem:[#allocation7]]
          %v370 = vstv %s369
          %v371 = vmul.f32 %v370, %v363
          %s372 = sld [smem:[#allocation7 + $0x1]]
          %v373 = vstv %s372
          %v374 = vmul.f32 %v373, %v357
          %v375 = vadd.f32 %v371, %v374
          %s376 = sld [smem:[#allocation7 + $0x2]]
          %v377 = vstv %s376
          %v378 = vmul.f32 %v377, %v368
          %v379 = vadd.f32 %v375, %v378
          %v380 = vxor.u32 %v379, 2147483648
          %v381 = vmul.f32 %v380, 1.442695
          %v382 = vpow.pop %v381
          %v383 = vadd.f32 %v382, 1.0
          %v384 = vrcp.pop %v383
          %v385 = vmul.f32 %v383, %v384
          %v386 = vsub.f32 1.0, %v385
          %v387 = vmul.f32 %v384, %v386
          %v388 = vadd.f32 %v384, %v387
          %vm389 = vweird.f32 %v383
          %vm390 = vweird.f32 %v384
          %vm391 = vmor %vm389, %vm390
          %v392 = vsel %vm391, %v384, %v388
          %v393 = vand.u32 2147483647, %v383
          %vm394 = vcmp.eq.f32.partialorder %v393, 8.507059e+37
          %v395 = vand.u32 %v383, 2147483648
          %v396 = vor.u32 1.1754944e-38, %v395
          %v397 = vsel %vm394, %v396, %v392
          %v398 = vmul.f32 1.0, %v397
          %399 = vst.msk [vmem:[%s193] sm:$0xff] %vm342, %v398
        $region44: #{tpu_custom_call.1} parent=27 // pred_fallthru
          _
        %s400 = sand.u32 %s89, 1
        %s401 = scalar_lea.sflag [#allocation5], %s400
        %s402 = sand.u32 %s89, 1
        %s403 = smul.addr %s402, 8
        %s404 = scalar_lea.vmem [#allocation8], %s403
        // Predicated region
        $region45: #{tpu_custom_call.1} parent=27 // pred_check
          %p405 = pneg %p99
        $region46: #{tpu_custom_call.1} parent=27 // pred_check_branch
          %407 = sbr.rel (%p405) target = $region48
        $region47: #{tpu_custom_call.1} parent=27 // pred_region
          %409 = vsyncadd %s401, 0
          %s410 = smul.addr %s24, 8
          %s411 = scalar_lea.hbm %s2, %s410
          %s413 = sshll.u32 %s404, 4
          %s414 = int_to_ptr.vmem [resolvable:$true] %s413
          %s415 = sshll.u32 %s411, 4
          %s416 = int_to_ptr.hbm [resolvable:$true] %s415
          %418 = dma.vmem_to_hbm [thread:$0]  %s414, 128, %s416, %s401
        $region48: #{tpu_custom_call.1} parent=27 // pred_fallthru
          _
      $region28: #{tpu_custom_call.1} parent=5 // pred_fallthru
        _
      %p419 = scmp.le.s32.totalorder 2, %s15
      // Predicated region
      $region49: #{tpu_custom_call.1} parent=5 // pred_check
        %p420 = pneg %p419
      $region50: #{tpu_custom_call.1} parent=5 // pred_check_branch
        %422 = sbr.rel (%p420) target = $region52
      $region51: #{tpu_custom_call.1} parent=5 // pred_region
        %s423 = ssub.s32 %s15, 2
        // Predicated region
        $region53: #{tpu_custom_call.1} parent=51 // pred_check
          %p424 = pneg %p105
        $region54: #{tpu_custom_call.1} parent=51 // pred_check_branch
          %426 = sbr.rel (%p424) target = $region56
        $region55: #{tpu_custom_call.1} parent=51 // pred_region
          %s427 = sand.u32 %s90, 1
          %s428 = scalar_lea.sflag [#allocation5], %s427
          %s429 = sand.u32 %s90, 1
          %s430 = smul.addr %s429, 8
          %s431 = scalar_lea.vmem [#allocation8], %s430
          %433 = dma.done %s428, 128
        $region56: #{tpu_custom_call.1} parent=51 // pred_fallthru
          _
      $region52: #{tpu_custom_call.1} parent=5 // pred_fallthru
        _
    $region6: #{tpu_custom_call.1} parent=1 // loop_footer
      %s19 = sadd.s32 1, %s15
    $region7: #{tpu_custom_call.1} parent=1 // loop_footer_branch
      %14 = sbr.rel target = $region3
    $region8: #{tpu_custom_call.1} parent=1 // loop_exit
      _
    %434 = vsyncpa [#allocation4], 1
    %s435 = scalar_lea.sflag [#allocation4], 1
    %436 = vsyncpa %s435, 1
    %437 = vsyncpa [#allocation5], 1
    %s438 = scalar_lea.sflag [#allocation5], 1
    %439 = vsyncpa %s438, 1
    %440 = vsyncpa [#allocation6], 1
    %s441 = scalar_lea.sflag [#allocation6], 1
    %442 = vsyncpa %s441, 1

</llo_original>
